<compile_context>
chip_gen: v5e
topology: v5e:2x2
jax: 0.10.0
libtpu: 0.0.40
codegen_flags: <defaults>
</compile_context>

<pallas_src>
import functools

import jax
import jax.numpy as jnp
import numpy as np
from jax.experimental import pallas as pl
from jax.experimental.pallas import tpu as pltpu

FRAME = 320  # wav2vec2 downsampling factor


# ----------------------------------------------------------------------------
# Fused encoder + masked-perceptual-loss kernel.
# Grid: (row_tiles, hidden_states); layer axis innermost carries VMEM state.
# ----------------------------------------------------------------------------
def _fused_kernel(vlen_ref,                # [B] int32, SMEM (scalar prefetch)
                  pf_ref, tf_ref,          # (TILE_R, FRAME) bf16 framed waves
                  w_in_ref,                # (FRAME, H) bf16 input projection
                  w_stk_ref,               # (1, H, H) bf16 weight for layer l
                  out_ref,                 # (1, 8, 128) f32 per-tile partial
                  h_ref,                   # (2*TILE_R, H) bf16 VMEM scratch
                  *, ploss_type, batch, frames_per_seq, tile_r):
    tile = pl.program_id(0)
    layer = pl.program_id(1)

    def masked_layer_sum(act_f32):
        # act_f32: (2*TILE_R, H) f32 -> masked L1/MSE raw sum for this layer.
        diff = act_f32[:tile_r] - act_f32[tile_r:]
        row = tile * tile_r + jax.lax.broadcasted_iota(
            jnp.int32, (tile_r, 1), 0)
        mask = jnp.zeros((tile_r, 1), jnp.float32)
        for b in range(batch):
            start = b * frames_per_seq
            mask = mask + jnp.where(
                (row >= start) & (row < start + vlen_ref[b]), 1.0, 0.0)
        diff = diff * mask                     # broadcast over hidden dim
        if ploss_type == "l1":
            return jnp.sum(jnp.abs(diff))
        return jnp.sum(diff * diff)            # mse

    @pl.when(layer == 0)
    def _input_projection():
        # Hidden state 0: one fused matmul for pred (top) and true (bottom).
        frames = jnp.concatenate([pf_ref[...], tf_ref[...]], axis=0)
        acc = jnp.dot(frames, w_in_ref[...],
                      preferred_element_type=jnp.float32)
        h_ref[...] = acc.astype(h_ref.dtype)
        out_ref[...] = jnp.zeros_like(out_ref) + masked_layer_sum(acc)

    @pl.when(layer > 0)
    def _encoder_layer():
        act = jnp.tanh(jnp.dot(h_ref[...], w_stk_ref[0],
                               preferred_element_type=jnp.float32))
        h_ref[...] = act.astype(h_ref.dtype)
        out_ref[...] += masked_layer_sum(act)


# ----------------------------------------------------------------------------
# Full forward (mirrors PerceptualLoss.forward)
# ----------------------------------------------------------------------------
def perceptual_loss(y_pred, y_true, lengths, params, config, *, tile_r=None):
    ploss_type = config["loss"]["ploss_type"]
    b, s = y_pred.shape
    t = s // FRAME
    hidden = params["w_in"].shape[1]
    w_layers = params["w_layers"]
    num_tanh = len(w_layers)
    num_states = num_tanh + 1
    rows = b * t

    # Row tile: multiple of 8 sublanes; sized so the per-tile working set
    # (2 framed blocks + bf16 hidden scratch + weights, double-buffered)
    # stays comfortably inside the 32 MiB scoped-VMEM budget requested below.
    if tile_r is None:
        tile_r = min(256, ((rows + 7) // 8) * 8)
    tile_r = max(8, (tile_r // 8) * 8)
    num_tiles = pl.cdiv(rows, tile_r)
    rows_pad = num_tiles * tile_r

    def frame(wave):
        fr = wave[:, : t * FRAME].reshape(rows, FRAME)
        if rows_pad > rows:
            # Padded rows are zero and masked out (never inside a valid range).
            fr = jnp.pad(fr, ((0, rows_pad - rows), (0, 0)))
        return fr.astype(jnp.bfloat16)

    pred_frames = frame(y_pred)
    true_frames = frame(y_true)
    w_in = params["w_in"].astype(jnp.bfloat16)
    if num_tanh:
        # In production this stacked bf16 weight would be prepared once.
        w_stack = jnp.stack([w.astype(jnp.bfloat16) for w in w_layers])
    else:
        w_stack = jnp.zeros((1, hidden, hidden), jnp.bfloat16)

    valid_lengths = jnp.minimum(lengths // FRAME, t).astype(jnp.int32)

    kernel = functools.partial(_fused_kernel, ploss_type=ploss_type,
                               batch=b, frames_per_seq=t, tile_r=tile_r)

    cost = pl.CostEstimate(
        flops=2 * (2 * rows_pad) * (FRAME * hidden
                                    + num_tanh * hidden * hidden),
        transcendentals=(2 * rows_pad) * hidden * num_tanh,
        bytes_accessed=(2 * (2 * rows_pad * FRAME)          # bf16 frames
                        + 2 * FRAME * hidden                 # bf16 w_in
                        + 2 * num_tanh * hidden * hidden * num_tiles
                        + 4 * num_tiles * 8 * 128
                        + 4 * b),
    )

    partials = pl.pallas_call(
        kernel,
        out_shape=jax.ShapeDtypeStruct((num_tiles, 8, 128), jnp.float32),
        grid_spec=pltpu.PrefetchScalarGridSpec(
            num_scalar_prefetch=1,
            grid=(num_tiles, num_states),
            in_specs=[
                # Framed waveforms: streamed per row tile (prefetched under
                # compute of the previous tile's layers). Last dim == full
                # array dim (320), so no HBM padding to 384 is needed.
                pl.BlockSpec((tile_r, FRAME), lambda r, l, vl: (r, 0)),
                pl.BlockSpec((tile_r, FRAME), lambda r, l, vl: (r, 0)),
                # Constant block index -> fetched once, stays resident.
                pl.BlockSpec((FRAME, hidden), lambda r, l, vl: (0, 0)),
                # Per-layer weight; no dummy slice: layer l>0 uses slice l-1,
                # layer 0 is guarded by pl.when (slice 0 simply stays cached).
                pl.BlockSpec((1, hidden, hidden),
                             lambda r, l, vl: (jnp.maximum(l - 1, 0), 0, 0)),
            ],
            # Lane-dense per-tile partial-sum block; constant over the layer
            # axis (accumulator), disjoint per row tile (parallel-safe).
            out_specs=pl.BlockSpec((1, 8, 128), lambda r, l, vl: (r, 0, 0)),
            scratch_shapes=[
                pltpu.VMEM((2 * tile_r, hidden), jnp.bfloat16),  # h pred|true
            ],
        ),
        compiler_params=pltpu.CompilerParams(
            dimension_semantics=("parallel", "arbitrary"),
            vmem_limit_bytes=32 * 1024 * 1024,
        ),
        cost_estimate=cost,
    )(valid_lengths, pred_frames, true_frames, w_in, w_stack)

    # Single normalization, hoisted out of the kernel: every layer divides by
    # the same sum(mask) = sum(valid_lengths) * hidden.
    mask_sum = jnp.sum(valid_lengths).astype(jnp.float32) * hidden
    return jnp.sum(partials[:, 0, 0]) / mask_sum


# ----------------------------------------------------------------------------
# Pure-JAX reference (full path: synthetic encoder + masked loss), mirroring
# the torch module's reduction semantics (f32 throughout).
# ----------------------------------------------------------------------------
def perceptual_loss_ref(y_pred, y_true, lengths, params, ploss_type):
    b, s = y_pred.shape
    t = s // FRAME
    hidden = params["w_in"].shape[1]

    def hidden_states(wave):
        frames = wave[:, : t * FRAME].reshape(b * t, FRAME)
        h = jnp.dot(frames, params["w_in"],
                    precision=jax.lax.Precision.HIGHEST)
        hs = [h]
        for w in params["w_layers"]:
            h = jnp.tanh(jnp.dot(h, w, precision=jax.lax.Precision.HIGHEST))
            hs.append(h)
        return [x.reshape(b, t, hidden) for x in hs]

    pred_hs = hidden_states(y_pred)
    true_hs = hidden_states(y_true)
    valid = jnp.minimum(lengths // FRAME, t)
    mask = (jnp.arange(t)[None, :] < valid[:, None]).astype(jnp.float32)
    mask = mask[:, :, None]                     # broadcast over hidden dim
    mask_sum = jnp.sum(mask) * hidden           # == sum of the [B,T,H] mask

    total = jnp.float32(0.0)
    for p, tt in zip(pred_hs, true_hs):
        d = (p - tt) * mask
        layer_sum = jnp.sum(jnp.abs(d)) if ploss_type == "l1" else jnp.sum(d * d)
        total = total + layer_sum / mask_sum
    return total


if __name__ == "__main__":
    B, T, H = 2, 16, 32           # batch, frames, hidden size
    NUM_LAYERS = 2                # -> 3 hidden states (input proj + 2 layers)
    S = T * FRAME                 # raw waveform length (samples)

    key = jax.random.PRNGKey(0)
    k_pred, k_true, k_win, k_w = jax.random.split(key, 4)

    # Deterministic frozen "model" parameters (synthetic, not a checkpoint).
    params = {
        "w_in": jax.random.normal(k_win, (FRAME, H), jnp.float32) * 0.05,
        "w_layers": [
            jax.random.normal(jax.random.fold_in(k_w, i), (H, H), jnp.float32)
            * 0.1
            for i in range(NUM_LAYERS)
        ],
    }

    y_pred = jax.random.normal(k_pred, (B, S), jnp.float32)
    y_true = jax.random.normal(k_true, (B, S), jnp.float32)
    lengths = jnp.array([S, 5 * FRAME + 13], dtype=jnp.int32)  # ragged batch

    for ploss_type in ("l1", "mse"):
        config = {"loss": {"ploss_type": ploss_type}}
        # tile_r=16 -> two row tiles, exercising tiling + partial-sum reduce.
        loss = perceptual_loss(y_pred, y_true, lengths, params, config,
                               tile_r=16)
        loss = jax.block_until_ready(loss)
        ref = perceptual_loss_ref(y_pred, y_true, lengths, params, ploss_type)
        # bf16 encoder with f32 accumulation vs f32-HIGHEST reference:
        # tolerance deliberately relaxed (perf-review recommendation).
        np.testing.assert_allclose(np.asarray(loss), np.asarray(ref),
                                   rtol=2e-2, atol=1e-4)

    print("KERNEL_OK")
</pallas_src>

<mosaic_0001>
module attributes {stable_mosaic.version = 11 : i64} {
  func.func @_fused_kernel(%arg0: i32, %arg1: i32, %arg2: memref<2xi32, #tpu.memory_space<smem>>, %arg3: memref<16x320xbf16, #tpu.memory_space<vmem>>, %arg4: memref<16x320xbf16, #tpu.memory_space<vmem>>, %arg5: memref<320x32xbf16, #tpu.memory_space<vmem>>, %arg6: memref<1x32x32xbf16, #tpu.memory_space<vmem>>, %arg7: memref<1x8x128xf32, #tpu.memory_space<vmem>>, %arg8: memref<32x32xbf16, #tpu.memory_space<vmem>>) attributes {dimension_semantics = [#tpu.dimension_semantics<parallel>, #tpu.dimension_semantics<arbitrary>], iteration_bounds = array<i64: 2, 3>, scalar_prefetch = 1 : i64, scratch_operands = 1 : i64, tpu.core_type = #tpu.core_type<tc>, window_params = [{transform_indices = @transform_0, window_bounds = array<i64: 16, 320>}, {transform_indices = @transform_1, window_bounds = array<i64: 16, 320>}, {pipeline_mode = #tpu.pipeline_mode<synchronous>, transform_indices = @transform_2, window_bounds = array<i64: 320, 32>}, {transform_indices = @transform_3, window_bounds = array<i64: 1, 32, 32>}, {transform_indices = @transform_4, window_bounds = array<i64: 1, 8, 128>}]} {
    %c0_i32 = arith.constant 0 : i32
    %0 = arith.cmpi eq, %arg1, %c0_i32 : i32
    %1 = arith.extui %0 : i1 to i32
    %c0_i32_0 = arith.constant 0 : i32
    %2 = arith.cmpi ne, %1, %c0_i32_0 : i32
    scf.if %2 {
      %c0 = arith.constant 0 : index
      %c0_3 = arith.constant 0 : index
      %6 = vector.load %arg3[%c0, %c0_3] : memref<16x320xbf16, #tpu.memory_space<vmem>>, vector<16x320xbf16>
      %c0_4 = arith.constant 0 : index
      %c0_5 = arith.constant 0 : index
      %7 = vector.load %arg4[%c0_4, %c0_5] : memref<16x320xbf16, #tpu.memory_space<vmem>>, vector<16x320xbf16>
      %8 = tpu.concatenate %6, %7 in 0 : vector<16x320xbf16>, vector<16x320xbf16> -> vector<32x320xbf16>
      %c0_6 = arith.constant 0 : index
      %c0_7 = arith.constant 0 : index
      %9 = vector.load %arg5[%c0_6, %c0_7] : memref<320x32xbf16, #tpu.memory_space<vmem>>, vector<320x32xbf16>
      %cst = arith.constant dense<0.000000e+00> : vector<32x32xf32>
      %10 = tpu.matmul %8, %9, %cst {dimension_numbers = #tpu.dot_dimension_numbers<[1], [0], [0], [1], [0, 0, 1, 1], [], []>} : vector<32x320xbf16>, vector<320x32xbf16>, vector<32x32xf32> -> vector<32x32xf32>
      %11 = arith.truncf %10 : vector<32x32xf32> to vector<32x32xbf16>
      %c0_8 = arith.constant 0 : index
      %c0_9 = arith.constant 0 : index
      %12 = vector.load %arg8[%c0_8, %c0_9] : memref<32x32xbf16, #tpu.memory_space<vmem>>, vector<32x32xbf16>
      tpu.vector_store %arg8[%c0_8, %c0_9], %11 {strides = array<i32>} : memref<32x32xbf16, #tpu.memory_space<vmem>>, vector<32x32xbf16>,
      %cst_10 = arith.constant 0.000000e+00 : f32
      %13 = vector.broadcast %cst_10 : f32 to vector<1x8x128xf32>
      %14 = vector.extract_strided_slice %10 {offsets = [0, 0], sizes = [16, 32], strides = [1, 1]} : vector<32x32xf32> to vector<16x32xf32>
      %15 = vector.extract_strided_slice %10 {offsets = [16, 0], sizes = [16, 32], strides = [1, 1]} : vector<32x32xf32> to vector<16x32xf32>
      %16 = arith.subf %14, %15 : vector<16x32xf32>
      %c16_i32 = arith.constant 16 : i32
      %17 = arith.muli %arg0, %c16_i32 : i32
      %18 = tpu.iota {dimensions = array<i32: 0>} : vector<16x1xi32>
      %19 = vector.broadcast %17 : i32 to vector<16x1xi32>
      %20 = arith.addi %19, %18 : vector<16x1xi32>
      %cst_11 = arith.constant 0.000000e+00 : f32
      %21 = vector.broadcast %cst_11 : f32 to vector<16x1xf32>
      %c0_i32_12 = arith.constant 0 : i32
      %22 = vector.broadcast %c0_i32_12 : i32 to vector<16x1xi32>
      %23 = arith.cmpi sge, %20, %22 : vector<16x1xi32>
      %c0_13 = arith.constant 0 : index
      %24 = memref.load %arg2[%c0_13] : memref<2xi32, #tpu.memory_space<smem>>
      %c0_i32_14 = arith.constant 0 : i32
      %25 = arith.addi %c0_i32_14, %24 : i32
      %26 = vector.broadcast %25 : i32 to vector<16x1xi32>
      %27 = arith.cmpi slt, %20, %26 : vector<16x1xi32>
      %28 = arith.andi %23, %27 : vector<16x1xi1>
      %cst_15 = arith.constant 1.000000e+00 : f32
      %cst_16 = arith.constant 0.000000e+00 : f32
      %29 = vector.broadcast %cst_15 : f32 to vector<16x1xf32>
      %30 = vector.broadcast %cst_16 : f32 to vector<16x1xf32>
      %31 = arith.select %28, %29, %30 : vector<16x1xi1>, vector<16x1xf32>
      %32 = arith.addf %21, %31 : vector<16x1xf32>
      %c16_i32_17 = arith.constant 16 : i32
      %33 = vector.broadcast %c16_i32_17 : i32 to vector<16x1xi32>
      %34 = arith.cmpi sge, %20, %33 : vector<16x1xi32>
      %c1 = arith.constant 1 : index
      %35 = memref.load %arg2[%c1] : memref<2xi32, #tpu.memory_space<smem>>
      %c16_i32_18 = arith.constant 16 : i32
      %36 = arith.addi %c16_i32_18, %35 : i32
      %37 = vector.broadcast %36 : i32 to vector<16x1xi32>
      %38 = arith.cmpi slt, %20, %37 : vector<16x1xi32>
      %39 = arith.andi %34, %38 : vector<16x1xi1>
      %cst_19 = arith.constant 1.000000e+00 : f32
      %cst_20 = arith.constant 0.000000e+00 : f32
      %40 = vector.broadcast %cst_19 : f32 to vector<16x1xf32>
      %41 = vector.broadcast %cst_20 : f32 to vector<16x1xf32>
      %42 = arith.select %39, %40, %41 : vector<16x1xi1>, vector<16x1xf32>
      %43 = arith.addf %32, %42 : vector<16x1xf32>
      %44 = vector.broadcast %43 : vector<16x1xf32> to vector<16x32xf32>
      %45 = arith.mulf %16, %44 : vector<16x32xf32>
      %46 = math.absf %45 : vector<16x32xf32>
      %47 = vector.shape_cast %46 : vector<16x32xf32> to vector<1x16x32xf32>
      %cst_21 = arith.constant dense<0.000000e+00> : vector<1xf32>
      %48 = vector.multi_reduction <add>, %47, %cst_21 [1, 2] : vector<1x16x32xf32> to vector<1xf32>
      %49 = vector.shape_cast %48 : vector<1xf32> to vector<1x1x1xf32>
      %50 = vector.extract %49[0, 0, 0] : f32 from vector<1x1x1xf32>
      %51 = vector.broadcast %50 : f32 to vector<1x8x128xf32>
      %52 = arith.addf %13, %51 : vector<1x8x128xf32>
      %c0_22 = arith.constant 0 : index
      %c0_23 = arith.constant 0 : index
      %c0_24 = arith.constant 0 : index
      %53 = vector.load %arg7[%c0_22, %c0_23, %c0_24] : memref<1x8x128xf32, #tpu.memory_space<vmem>>, vector<1x8x128xf32>
      tpu.vector_store %arg7[%c0_22, %c0_23, %c0_24], %52 {strides = array<i32>} : memref<1x8x128xf32, #tpu.memory_space<vmem>>, vector<1x8x128xf32>,
    } else {
    }
    %c0_i32_1 = arith.constant 0 : i32
    %3 = arith.cmpi sgt, %arg1, %c0_i32_1 : i32
    %4 = arith.extui %3 : i1 to i32
    %c0_i32_2 = arith.constant 0 : i32
    %5 = arith.cmpi ne, %4, %c0_i32_2 : i32
    scf.if %5 {
      %c0 = arith.constant 0 : index
      %c0_3 = arith.constant 0 : index
      %6 = vector.load %arg8[%c0, %c0_3] : memref<32x32xbf16, #tpu.memory_space<vmem>>, vector<32x32xbf16>
      %c0_4 = arith.constant 0 : index
      %c0_5 = arith.constant 0 : index
      %c0_6 = arith.constant 0 : index
      %7 = vector.load %arg6[%c0_4, %c0_5, %c0_6] : memref<1x32x32xbf16, #tpu.memory_space<vmem>>, vector<1x32x32xbf16>
      %8 = vector.shape_cast %7 : vector<1x32x32xbf16> to vector<32x32xbf16>
      %cst = arith.constant dense<0.000000e+00> : vector<32x32xf32>
      %9 = tpu.matmul %6, %8, %cst {dimension_numbers = #tpu.dot_dimension_numbers<[1], [0], [0], [1], [0, 0, 1, 1], [], []>} : vector<32x32xbf16>, vector<32x32xbf16>, vector<32x32xf32> -> vector<32x32xf32>
      %10 = math.tanh %9 : vector<32x32xf32>
      %11 = arith.truncf %10 : vector<32x32xf32> to vector<32x32xbf16>
      %c0_7 = arith.constant 0 : index
      %c0_8 = arith.constant 0 : index
      %12 = vector.load %arg8[%c0_7, %c0_8] : memref<32x32xbf16, #tpu.memory_space<vmem>>, vector<32x32xbf16>
      tpu.vector_store %arg8[%c0_7, %c0_8], %11 {strides = array<i32>} : memref<32x32xbf16, #tpu.memory_space<vmem>>, vector<32x32xbf16>,
      %c0_9 = arith.constant 0 : index
      %c0_10 = arith.constant 0 : index
      %c0_11 = arith.constant 0 : index
      %13 = vector.load %arg7[%c0_9, %c0_10, %c0_11] : memref<1x8x128xf32, #tpu.memory_space<vmem>>, vector<1x8x128xf32>
      %14 = vector.extract_strided_slice %10 {offsets = [0, 0], sizes = [16, 32], strides = [1, 1]} : vector<32x32xf32> to vector<16x32xf32>
      %15 = vector.extract_strided_slice %10 {offsets = [16, 0], sizes = [16, 32], strides = [1, 1]} : vector<32x32xf32> to vector<16x32xf32>
      %16 = arith.subf %14, %15 : vector<16x32xf32>
      %c16_i32 = arith.constant 16 : i32
      %17 = arith.muli %arg0, %c16_i32 : i32
      %18 = tpu.iota {dimensions = array<i32: 0>} : vector<16x1xi32>
      %19 = vector.broadcast %17 : i32 to vector<16x1xi32>
      %20 = arith.addi %19, %18 : vector<16x1xi32>
      %cst_12 = arith.constant 0.000000e+00 : f32
      %21 = vector.broadcast %cst_12 : f32 to vector<16x1xf32>
      %c0_i32_13 = arith.constant 0 : i32
      %22 = vector.broadcast %c0_i32_13 : i32 to vector<16x1xi32>
      %23 = arith.cmpi sge, %20, %22 : vector<16x1xi32>
      %c0_14 = arith.constant 0 : index
      %24 = memref.load %arg2[%c0_14] : memref<2xi32, #tpu.memory_space<smem>>
      %c0_i32_15 = arith.constant 0 : i32
      %25 = arith.addi %c0_i32_15, %24 : i32
      %26 = vector.broadcast %25 : i32 to vector<16x1xi32>
      %27 = arith.cmpi slt, %20, %26 : vector<16x1xi32>
      %28 = arith.andi %23, %27 : vector<16x1xi1>
      %cst_16 = arith.constant 1.000000e+00 : f32
      %cst_17 = arith.constant 0.000000e+00 : f32
      %29 = vector.broadcast %cst_16 : f32 to vector<16x1xf32>
      %30 = vector.broadcast %cst_17 : f32 to vector<16x1xf32>
      %31 = arith.select %28, %29, %30 : vector<16x1xi1>, vector<16x1xf32>
      %32 = arith.addf %21, %31 : vector<16x1xf32>
      %c16_i32_18 = arith.constant 16 : i32
      %33 = vector.broadcast %c16_i32_18 : i32 to vector<16x1xi32>
      %34 = arith.cmpi sge, %20, %33 : vector<16x1xi32>
      %c1 = arith.constant 1 : index
      %35 = memref.load %arg2[%c1] : memref<2xi32, #tpu.memory_space<smem>>
      %c16_i32_19 = arith.constant 16 : i32
      %36 = arith.addi %c16_i32_19, %35 : i32
      %37 = vector.broadcast %36 : i32 to vector<16x1xi32>
      %38 = arith.cmpi slt, %20, %37 : vector<16x1xi32>
      %39 = arith.andi %34, %38 : vector<16x1xi1>
      %cst_20 = arith.constant 1.000000e+00 : f32
      %cst_21 = arith.constant 0.000000e+00 : f32
      %40 = vector.broadcast %cst_20 : f32 to vector<16x1xf32>
      %41 = vector.broadcast %cst_21 : f32 to vector<16x1xf32>
      %42 = arith.select %39, %40, %41 : vector<16x1xi1>, vector<16x1xf32>
      %43 = arith.addf %32, %42 : vector<16x1xf32>
      %44 = vector.broadcast %43 : vector<16x1xf32> to vector<16x32xf32>
      %45 = arith.mulf %16, %44 : vector<16x32xf32>
      %46 = math.absf %45 : vector<16x32xf32>
      %47 = vector.shape_cast %46 : vector<16x32xf32> to vector<1x16x32xf32>
      %cst_22 = arith.constant dense<0.000000e+00> : vector<1xf32>
      %48 = vector.multi_reduction <add>, %47, %cst_22 [1, 2] : vector<1x16x32xf32> to vector<1xf32>
      %49 = vector.shape_cast %48 : vector<1xf32> to vector<1x1x1xf32>
      %50 = vector.extract %49[0, 0, 0] : f32 from vector<1x1x1xf32>
      %51 = vector.broadcast %50 : f32 to vector<1x8x128xf32>
      %52 = arith.addf %13, %51 : vector<1x8x128xf32>
      %c0_23 = arith.constant 0 : index
      %c0_24 = arith.constant 0 : index
      %c0_25 = arith.constant 0 : index
      %53 = vector.load %arg7[%c0_23, %c0_24, %c0_25] : memref<1x8x128xf32, #tpu.memory_space<vmem>>, vector<1x8x128xf32>
      tpu.vector_store %arg7[%c0_23, %c0_24, %c0_25], %52 {strides = array<i32>} : memref<1x8x128xf32, #tpu.memory_space<vmem>>, vector<1x8x128xf32>,
    } else {
    }
    return
  }
  func.func @transform_0(%arg0: i32, %arg1: i32, %arg2: memref<2xi32, #tpu.memory_space<smem>>) -> (i32, i32) {
    %c0_i32 = arith.constant 0 : i32
    %c0_i32_0 = arith.constant 0 : i32
    return %arg0, %c0_i32 : i32, i32
  }
  func.func @transform_1(%arg0: i32, %arg1: i32, %arg2: memref<2xi32, #tpu.memory_space<smem>>) -> (i32, i32) {
    %c0_i32 = arith.constant 0 : i32
    %c0_i32_0 = arith.constant 0 : i32
    return %arg0, %c0_i32 : i32, i32
  }
  func.func @transform_2(%arg0: i32, %arg1: i32, %arg2: memref<2xi32, #tpu.memory_space<smem>>) -> (i32, i32) {
    %c0_i32 = arith.constant 0 : i32
    %c0_i32_0 = arith.constant 0 : i32
    %c0_i32_1 = arith.constant 0 : i32
    return %c0_i32, %c0_i32_0 : i32, i32
  }
  func.func @transform_3(%arg0: i32, %arg1: i32, %arg2: memref<2xi32, #tpu.memory_space<smem>>) -> (i32, i32, i32) {
    %c1_i32 = arith.constant 1 : i32
    %0 = arith.subi %arg1, %c1_i32 : i32
    %c0_i32 = arith.constant 0 : i32
    %1 = arith.maxsi %0, %c0_i32 : i32
    %c0_i32_0 = arith.constant 0 : i32
    %c0_i32_1 = arith.constant 0 : i32
    %c0_i32_2 = arith.constant 0 : i32
    return %1, %c0_i32_0, %c0_i32_1 : i32, i32, i32
  }
  func.func @transform_4(%arg0: i32, %arg1: i32, %arg2: memref<2xi32, #tpu.memory_space<smem>>) -> (i32, i32, i32) {
    %c0_i32 = arith.constant 0 : i32
    %c0_i32_0 = arith.constant 0 : i32
    %c0_i32_1 = arith.constant 0 : i32
    return %arg0, %c0_i32, %c0_i32_0 : i32, i32, i32
  }
}

</mosaic_0001>

<llo_original>
// kernel: tpu_custom_call.1
$region0: #{tpu_custom_call.1}
  #allocation0 [shape = 'u32[]', space=smem, size = 0x4, offset = 0x4, fixed_abs, tag = 'smem constant byte address 0x4 - core index']
  #allocation1 [shape = 'u32[72,128]{1,0:T(1,128)}', space=vmem, size = 0x9000, scoped, tag = 'internal scratch']
  #allocation2 [shape = 'bf16[32,32]{1,0:T(8,128)(2,1)}', space=vmem, size = 0x2000, scoped, tag = 'scratch operand']
  #allocation3 [shape = 's32[1]{0}', space=sflag, size = 0x4, scoped, tag = 'scoped memory for tpu_custom_call.1']
  #allocation4 [shape = 'u8[512]{0}', space=smem, size = 0x200, scoped, tag = 'prefetched SMEM operand 0']
  %s0 = inlined_call_operand.vmem [shape: s32[2], index: 0, kind: input, shape index: {}]
  %s1 = inlined_call_operand.vmem [shape: bf16[32,320], index: 1, kind: input, shape index: {}]
  %s2 = inlined_call_operand.vmem [shape: bf16[32,320], index: 2, kind: input, shape index: {}]
  %s3 = inlined_call_operand.vmem [shape: bf16[320,32], index: 3, kind: input, shape index: {}]
  %s4 = inlined_call_operand.vmem [shape: bf16[2,32,32], index: 4, kind: input, shape index: {}]
  %s5 = inlined_call_operand.hbm [shape: f32[2,8,128], index: 5, kind: output, shape index: {}]
  %s6 = sld [smem:[#allocation0]]
  $region57: #{tpu_custom_call.1} parent=0
    _
  %s8 = ssub.s32 1, %s6
  %s9 = scalar_select 0, %s8, %s6
  %s11 = sshll.u32 %s0, 4
  %s12 = int_to_ptr.vmem [resolvable:$true] %s11
  %14 = dma.vmem_to_smem %s12, 16, [#allocation4], [#allocation3]
  %16 = dma.done [#allocation3], 16
  %17 = sfence
  $region1: #{tpu_custom_call.1} parent=0
    #allocation5 [shape = 'u8[8192]{0}', space=vmem, size = 0x2000, scoped, tag = 'output window, operand 0']
    #allocation6 [shape = 's32[2]{0}', space=sflag, size = 0x8, scoped, tag = 'scoped memory for tpu_custom_call.1']
    %18 = vsyncpa [#allocation6], 0
    %s19 = scalar_lea.sflag [#allocation6], 1
    %20 = vsyncpa %s19, 0
    loop: start=0, step=1, limit=8
    $region2: #{tpu_custom_call.1} parent=1 // loop_pre_header
      _
    $region3: #{tpu_custom_call.1} parent=1 // loop_header
      %s22 = sphi 0, %s26
      %p23 = scmp.ge.s32.totalorder %s22, 8
      %s29 = sphi 0, %s41
      %s30 = sphi 0, %s37
      %s31 = sphi 0, %s29
      %s32 = sphi 0, %s30
      %s33 = sphi 0, %s31
      %s34 = sphi 0, %s32
      %s44 = sphi 0, %s46
      %s47 = sphi 0, %s44
      %s48 = sphi 0, %s47
      %s64 = sphi 0, %s48
      %s70 = sphi 0, %s72
      %s73 = sphi 0, %s70
      %s74 = sphi 0, %s73
      %s90 = sphi 0, %s74
      %s94 = sphi 0, %s94
      %s96 = sphi 0, %s94
      %s97 = sphi 0, %s96
      %s111 = sphi 0, %s97
      %s123 = sphi 0, %s125
      %s126 = sphi 0, %s123
      %s127 = sphi 0, %s126
      %s143 = sphi 0, %s127
      %s149 = sphi 0, %s151
      %s152 = sphi 0, %s149
      %s153 = sphi 0, %s152
      %s169 = sphi 0, %s153
    $region4: #{tpu_custom_call.1} parent=1 // loop_header_branch
      %25 = sbr.rel (%p23) target = $region8
    $region5: #{tpu_custom_call.1} parent=1 // loop_body
      %s27 = ssub.s32 %s22, 1
      %s28 = ssub.s32 %s22, 2
      %s35 = sadd.s32 1, %s30
      %p36 = scmp.ge.s32.totalorder %s35, 3
      %s37 = scalar_select %p36, 0, %s35
      %s38 = sadd.s32 1, %s29
      %s39 = scalar_select %p36, %s38, %s29
      %p40 = scmp.ge.s32.totalorder %s39, 2
      %s41 = scalar_select %p40, 0, %s39
      %s42 = ssub.s32 %s29, %s41
      %p43 = scmp.eq.s32.totalorder %s42, 0
      %s45 = sadd.s32 %s44, 1
      %s46 = scalar_select %p43, %s44, %s45
      %p49 = pneg %p43
      %p50 = scmp.eq.s32.totalorder %s22, 5
      %p51 = por %p49, %p50
      %p52 = scmp.ne.s32.totalorder %s44, %s47
      %p53 = scmp.eq.s32.totalorder %s22, 0
      %p54 = por %p52, %p53
      %p55 = scmp.ne.s32.totalorder %s44, %s47
      %p56 = scmp.eq.s32.totalorder %s27, 5
      %p57 = por %p55, %p56
      %p58 = scmp.ne.s32.totalorder %s47, %s48
      %p59 = scmp.eq.s32.totalorder %s27, 0
      %p60 = por %p58, %p59
      %p61 = scmp.ne.s32.totalorder %s47, %s48
      %p62 = scmp.eq.s32.totalorder %s28, 5
      %p63 = por %p61, %p62
      %p65 = scmp.ne.s32.totalorder %s48, %s64
      %p66 = scmp.eq.s32.totalorder %s28, 0
      %p67 = por %p65, %p66
      %s68 = ssub.s32 %s29, %s41
      %p69 = scmp.eq.s32.totalorder %s68, 0
      %s71 = sadd.s32 %s70, 1
      %s72 = scalar_select %p69, %s70, %s71
      %p75 = pneg %p69
      %p76 = scmp.eq.s32.totalorder %s22, 5
      %p77 = por %p75, %p76
      %p78 = scmp.ne.s32.totalorder %s70, %s73
      %p79 = scmp.eq.s32.totalorder %s22, 0
      %p80 = por %p78, %p79
      %p81 = scmp.ne.s32.totalorder %s70, %s73
      %p82 = scmp.eq.s32.totalorder %s27, 5
      %p83 = por %p81, %p82
      %p84 = scmp.ne.s32.totalorder %s73, %s74
      %p85 = scmp.eq.s32.totalorder %s27, 0
      %p86 = por %p84, %p85
      %p87 = scmp.ne.s32.totalorder %s73, %s74
      %p88 = scmp.eq.s32.totalorder %s28, 5
      %p89 = por %p87, %p88
      %p91 = scmp.ne.s32.totalorder %s74, %s90
      %p92 = scmp.eq.s32.totalorder %s28, 0
      %p93 = por %p91, %p92
      %s95 = sadd.s32 %s94, 1
      %p98 = scmp.eq.s32.totalorder %s22, 5
      %p99 = scmp.ne.s32.totalorder %s94, %s96
      %p100 = scmp.eq.s32.totalorder %s22, 0
      %p101 = por %p99, %p100
      %p102 = scmp.ne.s32.totalorder %s94, %s96
      %p103 = scmp.eq.s32.totalorder %s27, 5
      %p104 = por %p102, %p103
      %p105 = scmp.ne.s32.totalorder %s96, %s97
      %p106 = scmp.eq.s32.totalorder %s27, 0
      %p107 = por %p105, %p106
      %p108 = scmp.ne.s32.totalorder %s96, %s97
      %p109 = scmp.eq.s32.totalorder %s28, 5
      %p110 = por %p108, %p109
      %p112 = scmp.ne.s32.totalorder %s97, %s111
      %p113 = scmp.eq.s32.totalorder %s28, 0
      %p114 = por %p112, %p113
      %s115 = ssub.s32 %s30, 1
      %p116 = scmp.gt.s32.totalorder %s115, 0
      %s117 = scalar_select %p116, %s115, 0
      %s118 = ssub.s32 %s37, 1
      %p119 = scmp.gt.s32.totalorder %s118, 0
      %s120 = scalar_select %p119, %s118, 0
      %s121 = ssub.s32 %s117, %s120
      %p122 = scmp.eq.s32.totalorder %s121, 0
      %s124 = sadd.s32 %s123, 1
      %s125 = scalar_select %p122, %s123, %s124
      %p128 = pneg %p122
      %p129 = scmp.eq.s32.totalorder %s22, 5
      %p130 = por %p128, %p129
      %p131 = scmp.ne.s32.totalorder %s123, %s126
      %p132 = scmp.eq.s32.totalorder %s22, 0
      %p133 = por %p131, %p132
      %p134 = scmp.ne.s32.totalorder %s123, %s126
      %p135 = scmp.eq.s32.totalorder %s27, 5
      %p136 = por %p134, %p135
      %p137 = scmp.ne.s32.totalorder %s126, %s127
      %p138 = scmp.eq.s32.totalorder %s27, 0
      %p139 = por %p137, %p138
      %p140 = scmp.ne.s32.totalorder %s126, %s127
      %p141 = scmp.eq.s32.totalorder %s28, 5
      %p142 = por %p140, %p141
      %p144 = scmp.ne.s32.totalorder %s127, %s143
      %p145 = scmp.eq.s32.totalorder %s28, 0
      %p146 = por %p144, %p145
      %s147 = ssub.s32 %s29, %s41
      %p148 = scmp.eq.s32.totalorder %s147, 0
      %s150 = sadd.s32 %s149, 1
      %s151 = scalar_select %p148, %s149, %s150
      %p154 = pneg %p148
      %p155 = scmp.eq.s32.totalorder %s22, 5
      %p156 = por %p154, %p155
      %p157 = scmp.ne.s32.totalorder %s149, %s152
      %p158 = scmp.eq.s32.totalorder %s22, 0
      %p159 = por %p157, %p158
      %p160 = scmp.ne.s32.totalorder %s149, %s152
      %p161 = scmp.eq.s32.totalorder %s27, 5
      %p162 = por %p160, %p161
      %p163 = scmp.ne.s32.totalorder %s152, %s153
      %p164 = scmp.eq.s32.totalorder %s27, 0
      %p165 = por %p163, %p164
      %p166 = scmp.ne.s32.totalorder %s152, %s153
      %p167 = scmp.eq.s32.totalorder %s28, 5
      %p168 = por %p166, %p167
      %p170 = scmp.ne.s32.totalorder %s153, %s169
      %p171 = scmp.eq.s32.totalorder %s28, 0
      %p172 = por %p170, %p171
      %p173 = scmp.le.s32.totalorder 1, %s22
      %p174 = scmp.lt.s32.totalorder %s22, 7
      %p175 = pnand %p173, %p174
      %p176 = pneg %p175
      // Predicated region
      $region9: #{tpu_custom_call.1} parent=5 // pred_check
        _
      $region10: #{tpu_custom_call.1} parent=5 // pred_check_branch
        %178 = sbr.rel (%p175) target = $region12
      $region11: #{tpu_custom_call.1} parent=5 // pred_region
        %s179 = ssub.s32 %s22, 1
        // Predicated region
        $region13: #{tpu_custom_call.1} parent=11 // pred_check
          %p180 = pneg %p107
        $region14: #{tpu_custom_call.1} parent=11 // pred_check_branch
          %182 = sbr.rel (%p180) target = $region16
        $region15: #{tpu_custom_call.1} parent=11 // pred_region
          _
        $region16: #{tpu_custom_call.1} parent=11 // pred_fallthru
          _
      $region12: #{tpu_custom_call.1} parent=5 // pred_fallthru
        _
      %p183 = scmp.lt.s32.totalorder %s22, 6
      // Predicated region
      $region17: #{tpu_custom_call.1} parent=5 // pred_check
        %p184 = pneg %p183
      $region18: #{tpu_custom_call.1} parent=5 // pred_check_branch
        %186 = sbr.rel (%p184) target = $region20
      $region19: #{tpu_custom_call.1} parent=5 // pred_region
        // Predicated region
        $region21: #{tpu_custom_call.1} parent=19 // pred_check
          %p187 = pneg %p54
        $region22: #{tpu_custom_call.1} parent=19 // pred_check_branch
          %189 = sbr.rel (%p187) target = $region24
        $region23: #{tpu_custom_call.1} parent=19 // pred_region
          %s190 = smul.u32 2, %s29
          %p191 = scmp.lt.s32.totalorder %s190, 3
          %s192 = scalar_select %p191, %s190, 3
          %s193 = smul.addr %s192, 3
          %s194 = smul.addr %s193, 4
          %s195 = scalar_lea.vmem %s1, %s194
          %s196 = smul.u32 2, %s29
        $region24: #{tpu_custom_call.1} parent=19 // pred_fallthru
          _
        // Predicated region
        $region25: #{tpu_custom_call.1} parent=19 // pred_check
          %p197 = pneg %p80
        $region26: #{tpu_custom_call.1} parent=19 // pred_check_branch
          %199 = sbr.rel (%p197) target = $region28
        $region27: #{tpu_custom_call.1} parent=19 // pred_region
          %s200 = smul.u32 2, %s29
          %p201 = scmp.lt.s32.totalorder %s200, 3
          %s202 = scalar_select %p201, %s200, 3
          %s203 = smul.addr %s202, 3
          %s204 = smul.addr %s203, 4
          %s205 = scalar_lea.vmem %s2, %s204
          %s206 = smul.u32 2, %s29
        $region28: #{tpu_custom_call.1} parent=19 // pred_fallthru
          _
        // Predicated region
        $region29: #{tpu_custom_call.1} parent=19 // pred_check
          %p207 = pneg %p133
        $region30: #{tpu_custom_call.1} parent=19 // pred_check_branch
          %209 = sbr.rel (%p207) target = $region32
        $region31: #{tpu_custom_call.1} parent=19 // pred_region
          %s210 = ssub.s32 %s30, 1
          %p211 = scmp.gt.s32.totalorder %s210, 0
          %s212 = scalar_select %p211, %s210, 0
          %p213 = scmp.lt.s32.totalorder %s212, 1
          %s214 = scalar_select %p213, %s212, 1
          %s215 = smul.addr %s214, 4
          %s216 = smul.addr %s215, 4
          %s217 = scalar_lea.vmem %s4, %s216
          %s218 = ssub.s32 %s30, 1
          %p219 = scmp.gt.s32.totalorder %s218, 0
          %s220 = scalar_select %p219, %s218, 0
        $region32: #{tpu_custom_call.1} parent=19 // pred_fallthru
          _
      $region20: #{tpu_custom_call.1} parent=5 // pred_fallthru
        _
      %p221 = scmp.le.s32.totalorder 1, %s22
      %p222 = scmp.lt.s32.totalorder %s22, 7
      %p223 = pnand %p221, %p222
      %p224 = pneg %p223
      // Predicated region
      $region33: #{tpu_custom_call.1} parent=5 // pred_check
        _
      $region34: #{tpu_custom_call.1} parent=5 // pred_check_branch
        %226 = sbr.rel (%p223) target = $region36
      $region35: #{tpu_custom_call.1} parent=5 // pred_region
        %s227 = ssub.s32 %s22, 1
        %s228 = smul.u32 2, %s31
        %p229 = scmp.lt.s32.totalorder %s228, 3
        %s230 = scalar_select %p229, %s228, 3
        %s231 = smul.addr %s230, 3
        %s232 = smul.addr %s231, 4
        %s233 = scalar_lea.vmem %s1, %s232
        %p234 = pneg %p60
        %p235 = pneg %p57
        %s236 = smul.u32 2, %s31
        %p237 = scmp.lt.s32.totalorder %s236, 3
        %s238 = scalar_select %p237, %s236, 3
        %s239 = smul.addr %s238, 3
        %s240 = smul.addr %s239, 4
        %s241 = scalar_lea.vmem %s2, %s240
        %p242 = pneg %p86
        %p243 = pneg %p83
        %p244 = pneg %p107
        %p245 = pneg %p104
        %s246 = ssub.s32 %s32, 1
        %p247 = scmp.gt.s32.totalorder %s246, 0
        %s248 = scalar_select %p247, %s246, 0
        %p249 = scmp.lt.s32.totalorder %s248, 1
        %s250 = scalar_select %p249, %s248, 1
        %s251 = smul.addr %s250, 4
        %s252 = smul.addr %s251, 4
        %s253 = scalar_lea.vmem %s4, %s252
        %p254 = pneg %p139
        %p255 = pneg %p136
        %p256 = pneg %p165
        %p257 = pneg %p162
        %s258 = sand.u32 %s152, 1
        %s259 = scalar_lea.sflag [#allocation6], %s258
        %s260 = sand.u32 %s152, 1
        %s261 = smul.addr %s260, 8
        %s262 = scalar_lea.vmem [#allocation5], %s261
        %s263 = smul.u32 2, %s31
        %p264 = scmp.lt.s32.totalorder %s263, 3
        %s265 = scalar_select %p264, %s263, 3
        %s266 = smul.addr %s265, 3
        %s267 = smul.addr %s266, 4
        %s268 = scalar_lea.vmem %s1, %s267
        %s269 = smul.u32 2, %s31
        %s270 = smul.u32 2, %s31
        %p271 = scmp.lt.s32.totalorder %s270, 3
        %s272 = scalar_select %p271, %s270, 3
        %s273 = smul.addr %s272, 3
        %s274 = smul.addr %s273, 4
        %s275 = scalar_lea.vmem %s2, %s274
        %s276 = smul.u32 2, %s31
        %s277 = ssub.s32 %s32, 1
        %p278 = scmp.gt.s32.totalorder %s277, 0
        %s279 = scalar_select %p278, %s277, 0
        %p280 = scmp.lt.s32.totalorder %s279, 1
        %s281 = scalar_select %p280, %s279, 1
        %s282 = smul.addr %s281, 4
        %s283 = smul.addr %s282, 4
        %s284 = scalar_lea.vmem %s4, %s283
        %s285 = ssub.s32 %s32, 1
        %p286 = scmp.gt.s32.totalorder %s285, 0
        %s287 = scalar_select %p286, %s285, 0
        %p289 = scmp.eq.s32.totalorder %s32, 0
        // Predicated region
        $region37: #{tpu_custom_call.1} parent=35 // pred_check
          %p290 = pneg %p289
        $region38: #{tpu_custom_call.1} parent=35 // pred_check_branch
          %292 = sbr.rel (%p290) target = $region40
        $region39: #{tpu_custom_call.1} parent=35 // pred_region
          %v293 = vld [vmem:[%s268] sm:$0xff]
          %v294 = vld [vmem:[%s268 + $0x8] sm:$0xf]
          %v295 = vld [vmem:[%s268 + $0xc] sm:$0xff]
          %v296 = vld [vmem:[%s268 + $0x14] sm:$0xf]
          %v297 = vld [vmem:[%s275] sm:$0xff]
          %v298 = vld [vmem:[%s275 + $0x8] sm:$0xf]
          %v299 = vld [vmem:[%s275 + $0xc] sm:$0xff]
          %v300 = vld [vmem:[%s275 + $0x14] sm:$0xf]
          %v305 = vunpack.c.l.b16 %v293
          %v306 = vunpack.c.h.b16 %v293
          %v307 = vunpack.c.l.b16 %v294
          %v308 = vunpack.c.l.b16 %v295
          %v309 = vunpack.c.h.b16 %v295
          %v310 = vunpack.c.l.b16 %v296
          %v311 = vpack.c.b16 %v308, %v305
          %v312 = vpack.c.b16 %v309, %v306
          %v313 = vpack.c.b16 %v310, %v307
          %v320 = vunpack.c.l.b16 %v297
          %v321 = vunpack.c.h.b16 %v297
          %v322 = vunpack.c.l.b16 %v298
          %v323 = vunpack.c.l.b16 %v299
          %v324 = vunpack.c.h.b16 %v299
          %v325 = vunpack.c.l.b16 %v300
          %v326 = vpack.c.b16 %v323, %v320
          %v327 = vpack.c.b16 %v324, %v321
          %v328 = vpack.c.b16 %v325, %v322
          %v331 = vld [vmem:[%s3] sm:$0xf]
          %v332 = vld [vmem:[%s3 + $0x4] sm:$0xf]
          %v333 = vld [vmem:[%s3 + $0x8] sm:$0xf]
          %v334 = vld [vmem:[%s3 + $0xc] sm:$0xf]
          %v335 = vld [vmem:[%s3 + $0x10] sm:$0xf]
          %v336 = vld [vmem:[%s3 + $0x14] sm:$0xf]
          %v337 = vld [vmem:[%s3 + $0x18] sm:$0xf]
          %v338 = vld [vmem:[%s3 + $0x1c] sm:$0xf]
          %v339 = vld [vmem:[%s3 + $0x20] sm:$0xf]
          %v340 = vld [vmem:[%s3 + $0x24] sm:$0xf]
          %v341 = vld [vmem:[%s3 + $0x28] sm:$0xf]
          %v342 = vld [vmem:[%s3 + $0x2c] sm:$0xf]
          %v343 = vld [vmem:[%s3 + $0x30] sm:$0xf]
          %v344 = vld [vmem:[%s3 + $0x34] sm:$0xf]
          %v345 = vld [vmem:[%s3 + $0x38] sm:$0xf]
          %v346 = vld [vmem:[%s3 + $0x3c] sm:$0xf]
          %v347 = vld [vmem:[%s3 + $0x40] sm:$0xf]
          %v348 = vld [vmem:[%s3 + $0x44] sm:$0xf]
          %v349 = vld [vmem:[%s3 + $0x48] sm:$0xf]
          %v350 = vld [vmem:[%s3 + $0x4c] sm:$0xf]
          %v351 = vld [vmem:[%s3 + $0x50] sm:$0xf]
          %v352 = vld [vmem:[%s3 + $0x54] sm:$0xf]
          %v353 = vld [vmem:[%s3 + $0x58] sm:$0xf]
          %v354 = vld [vmem:[%s3 + $0x5c] sm:$0xf]
          %v355 = vld [vmem:[%s3 + $0x60] sm:$0xf]
          %v356 = vld [vmem:[%s3 + $0x64] sm:$0xf]
          %v357 = vld [vmem:[%s3 + $0x68] sm:$0xf]
          %v358 = vld [vmem:[%s3 + $0x6c] sm:$0xf]
          %v359 = vld [vmem:[%s3 + $0x70] sm:$0xf]
          %v360 = vld [vmem:[%s3 + $0x74] sm:$0xf]
          %v361 = vld [vmem:[%s3 + $0x78] sm:$0xf]
          %v362 = vld [vmem:[%s3 + $0x7c] sm:$0xf]
          %v363 = vld [vmem:[%s3 + $0x80] sm:$0xf]
          %v364 = vld [vmem:[%s3 + $0x84] sm:$0xf]
          %v365 = vld [vmem:[%s3 + $0x88] sm:$0xf]
          %v366 = vld [vmem:[%s3 + $0x8c] sm:$0xf]
          %v367 = vld [vmem:[%s3 + $0x90] sm:$0xf]
          %v368 = vld [vmem:[%s3 + $0x94] sm:$0xf]
          %v369 = vld [vmem:[%s3 + $0x98] sm:$0xf]
          %v370 = vld [vmem:[%s3 + $0x9c] sm:$0xf]
          %v411 = vunpack.c.l.b16 %v331
          %v412 = vunpack.c.l.b16 %v332
          %v413 = vunpack.c.l.b16 %v333
          %v414 = vunpack.c.l.b16 %v334
          %v415 = vunpack.c.l.b16 %v335
          %v416 = vunpack.c.l.b16 %v336
          %v417 = vunpack.c.l.b16 %v337
          %v418 = vunpack.c.l.b16 %v338
          %v419 = vunpack.c.l.b16 %v339
          %v420 = vunpack.c.l.b16 %v340
          %v421 = vunpack.c.l.b16 %v341
          %v422 = vunpack.c.l.b16 %v342
          %v423 = vunpack.c.l.b16 %v343
          %v424 = vunpack.c.l.b16 %v344
          %v425 = vunpack.c.l.b16 %v345
          %v426 = vunpack.c.l.b16 %v346
          %v427 = vunpack.c.l.b16 %v347
          %v428 = vunpack.c.l.b16 %v348
          %v429 = vunpack.c.l.b16 %v349
          %v430 = vunpack.c.l.b16 %v350
          %v431 = vunpack.c.l.b16 %v351
          %v432 = vunpack.c.l.b16 %v352
          %v433 = vunpack.c.l.b16 %v353
          %v434 = vunpack.c.l.b16 %v354
          %v435 = vunpack.c.l.b16 %v355
          %v436 = vunpack.c.l.b16 %v356
          %v437 = vunpack.c.l.b16 %v357
          %v438 = vunpack.c.l.b16 %v358
          %v439 = vunpack.c.l.b16 %v359
          %v440 = vunpack.c.l.b16 %v360
          %v441 = vunpack.c.l.b16 %v361
          %v442 = vunpack.c.l.b16 %v362
          %v443 = vunpack.c.l.b16 %v363
          %v444 = vunpack.c.l.b16 %v364
          %v445 = vunpack.c.l.b16 %v365
          %v446 = vunpack.c.l.b16 %v366
          %v447 = vunpack.c.l.b16 %v367
          %v448 = vunpack.c.l.b16 %v368
          %v449 = vunpack.c.l.b16 %v369
          %v450 = vunpack.c.l.b16 %v370
          %v451 = vpack.c.b16 %v412, %v411
          %v452 = vpack.c.b16 %v414, %v413
          %v453 = vpack.c.b16 %v416, %v415
          %v454 = vpack.c.b16 %v418, %v417
          %v455 = vpack.c.b16 %v420, %v419
          %v456 = vpack.c.b16 %v422, %v421
          %v457 = vpack.c.b16 %v424, %v423
          %v458 = vpack.c.b16 %v426, %v425
          %v459 = vpack.c.b16 %v428, %v427
          %v460 = vpack.c.b16 %v430, %v429
          %v461 = vpack.c.b16 %v432, %v431
          %v462 = vpack.c.b16 %v434, %v433
          %v463 = vpack.c.b16 %v436, %v435
          %v464 = vpack.c.b16 %v438, %v437
          %v465 = vpack.c.b16 %v440, %v439
          %v466 = vpack.c.b16 %v442, %v441
          %v467 = vpack.c.b16 %v444, %v443
          %v468 = vpack.c.b16 %v446, %v445
          %v469 = vpack.c.b16 %v448, %v447
          %v470 = vpack.c.b16 %v450, %v449
          %vm491 = vcmask 523264
          %v493 = vsel %vm491, %v313, 0
          %v496 = vsel %vm491, %v328, 0
          %498 = vmatpush.bf16.msra.mxu0 %v458
          %499 = vmatpush.bf16.msra.mxu0 %v457
          %500 = vmatpush.bf16.msra.mxu0 %v456
          %501 = vmatpush.bf16.msra.mxu0 %v455
          %502 = vmatpush.bf16.msra.mxu0 %v454
          %503 = vmatpush.bf16.msra.mxu0 %v453
          %504 = vmatpush.bf16.msra.mxu0 %v452
          %505 = vmatpush.bf16.msra.mxu0 %v451
          %506 = vmatmul.bf16.gmra.mxu0 %v311
          %v507 = vpop.f32.mrf.mxu0
          %v508 = vadd.f32 0.0, %v507
          %v509 = vpop.f32.mrf.mxu0
          %v510 = vadd.f32 0.0, %v509
          %511 = vmatmul.bf16.gmra.mxu0 %v326
          %v512 = vpop.f32.mrf.mxu0
          %v513 = vadd.f32 0.0, %v512
          %v514 = vpop.f32.mrf.mxu0
          %v515 = vadd.f32 0.0, %v514
          %516 = vdwg.mxu0
          %517 = vmatpush.bf16.msra.mxu0 %v466
          %518 = vmatpush.bf16.msra.mxu0 %v465
          %519 = vmatpush.bf16.msra.mxu0 %v464
          %520 = vmatpush.bf16.msra.mxu0 %v463
          %521 = vmatpush.bf16.msra.mxu0 %v462
          %522 = vmatpush.bf16.msra.mxu0 %v461
          %523 = vmatpush.bf16.msra.mxu0 %v460
          %524 = vmatpush.bf16.msra.mxu0 %v459
          %525 = vmatmul.bf16.gmra.mxu0 %v312
          %v526 = vpop.f32.mrf.mxu0
          %v527 = vadd.f32 %v508, %v526
          %v528 = vpop.f32.mrf.mxu0
          %v529 = vadd.f32 %v510, %v528
          %530 = vmatmul.bf16.gmra.mxu0 %v327
          %v531 = vpop.f32.mrf.mxu0
          %v532 = vadd.f32 %v513, %v531
          %v533 = vpop.f32.mrf.mxu0
          %v534 = vadd.f32 %v515, %v533
          %535 = vdwg.mxu0
          %536 = vmatpush.bf16.msra.mxu0 0
          %537 = vmatpush.bf16.msra.mxu0 0
          %538 = vmatpush.bf16.msra.mxu0 0
          %539 = vmatpush.bf16.msra.mxu0 0
          %540 = vmatpush.bf16.msra.mxu0 %v470
          %541 = vmatpush.bf16.msra.mxu0 %v469
          %542 = vmatpush.bf16.msra.mxu0 %v468
          %543 = vmatpush.bf16.msra.mxu0 %v467
          %544 = vmatmul.bf16.gmra.mxu0 %v493
          %v545 = vpop.f32.mrf.mxu0
          %v546 = vadd.f32 %v527, %v545
          %v547 = vpop.f32.mrf.mxu0
          %v548 = vadd.f32 %v529, %v547
          %549 = vmatmul.bf16.gmra.mxu0 %v496
          %v550 = vpop.f32.mrf.mxu0
          %v551 = vadd.f32 %v532, %v550
          %v552 = vpop.f32.mrf.mxu0
          %v553 = vadd.f32 %v534, %v552
          %554 = vdwg.mxu0
          %v555 = vpack.c.bf16 %v546, %v546
          %v556 = vpack.c.bf16 %v548, %v548
          %v557 = vpack.c.bf16 %v551, %v551
          %v558 = vpack.c.bf16 %v553, %v553
          %vm559 = vcmask 257024
          %560 = vst.msk [vmem:[#allocation2] sm:$0xf] %vm559, %v555
          %561 = vst.msk [vmem:[#allocation2 + $0x4] sm:$0xf] %vm559, %v556
          %562 = vst.msk [vmem:[#allocation2 + $0x8] sm:$0xf] %vm559, %v557
          %563 = vst.msk [vmem:[#allocation2 + $0xc] sm:$0xf] %vm559, %v558
          %v564 = vsub.f32 %v546, %v551
          %v565 = vsub.f32 %v548, %v553
          %s566 = smul.u32 %s31, 16
          %v567 = vlaneseq
          %v568 = vshrl.u32 %v567, 7
          %v569 = vadd.s32 %v568, 8
          %v570 = vstv %s566
          %v571 = vadd.s32 %v570, %v568
          %v572 = vadd.s32 %v570, %v569
          %vm573 = vcmp.ge.s32.totalorder %v571, 0
          %vm574 = vcmp.ge.s32.totalorder %v572, 0
          %s575 = sld [smem:[#allocation4]]
          %v576 = vstv %s575
          %vm577 = vcmp.lt.s32.totalorder %v571, %v576
          %vm578 = vcmp.lt.s32.totalorder %v572, %v576
          %vm579 = vmand %vm573, %vm577
          %vm580 = vmand %vm574, %vm578
          %v581 = vsel %vm579, 1.0, 0.0
          %v582 = vsel %vm580, 1.0, 0.0
          %v583 = vadd.f32 %v581, 0.0
          %v584 = vadd.f32 %v582, 0.0
          %vm585 = vcmp.ge.s32.totalorder %v571, 16
          %vm586 = vcmp.ge.s32.totalorder %v572, 16
          %s587 = sld [smem:[#allocation4 + $0x1]]
          %s588 = sadd.s32 %s587, 16
          %v589 = vstv %s588
          %vm590 = vcmp.lt.s32.totalorder %v571, %v589
          %vm591 = vcmp.lt.s32.totalorder %v572, %v589
          %vm592 = vmand %vm585, %vm590
          %vm593 = vmand %vm586, %vm591
          %v594 = vsel %vm592, 1.0, 0.0
          %v595 = vsel %vm593, 1.0, 0.0
          %v596 = vadd.f32 %v583, %v594
          %v597 = vadd.f32 %v584, %v595
          %v598 = vmul.f32 %v564, %v596
          %v599 = vmul.f32 %v565, %v597
          %v600 = vand.u32 2147483647, %v598
          %v601 = vand.u32 2147483647, %v599
          %vm602 = vcmask 261120
          %v603 = vsel %vm602, %v600, 0.0
          %v604 = vsel %vm602, %v601, 0.0
          %v605 = vadd.f32 %v603, %v604
          %606 = vadd.xlane.f32.xlu0 %v605
          %v607 = vpop.xlane.xlu0 %606
          %v608 = vrot.slane %v607, 4
          %v609 = vadd.f32 %v607, %v608
          %v610 = vrot.slane %v609, 2
          %v611 = vadd.f32 %v609, %v610
          %v612 = vrot.slane %v611, 1
          %v613 = vadd.f32 %v611, %v612
          %s614 = vtos %v613
          %v615 = vstv %s614
          %v616 = vadd.f32 %v615, 0.0
          %617 = vst [vmem:[%s262] sm:$0xff] %v616
        $region40: #{tpu_custom_call.1} parent=35 // pred_fallthru
          _
        %p618 = scmp.gt.s32.totalorder %s32, 0
        // Predicated region
        $region41: #{tpu_custom_call.1} parent=35 // pred_check
          %p619 = pneg %p618
        $region42: #{tpu_custom_call.1} parent=35 // pred_check_branch
          %621 = sbr.rel (%p619) target = $region44
        $region43: #{tpu_custom_call.1} parent=35 // pred_region
          %v622 = vld [vmem:[#allocation2] sm:$0xf]
          %v623 = vld [vmem:[#allocation2 + $0x4] sm:$0xf]
          %v624 = vld [vmem:[#allocation2 + $0x8] sm:$0xf]
          %v625 = vld [vmem:[#allocation2 + $0xc] sm:$0xf]
          %v626 = vld [vmem:[%s284] sm:$0xf]
          %v627 = vld [vmem:[%s284 + $0x4] sm:$0xf]
          %v628 = vld [vmem:[%s284 + $0x8] sm:$0xf]
          %v629 = vld [vmem:[%s284 + $0xc] sm:$0xf]
          %v634 = vunpack.c.l.b16 %v622
          %v635 = vunpack.c.l.b16 %v623
          %v636 = vunpack.c.l.b16 %v624
          %v637 = vunpack.c.l.b16 %v625
          %v638 = vpack.c.b16 %v635, %v634
          %v639 = vpack.c.b16 %v637, %v636
          %v644 = vunpack.c.l.b16 %v626
          %v645 = vunpack.c.l.b16 %v627
          %v646 = vunpack.c.l.b16 %v628
          %v647 = vunpack.c.l.b16 %v629
          %v648 = vpack.c.b16 %v645, %v644
          %v649 = vpack.c.b16 %v647, %v646
          %vm652 = vcmask 261120
          %v654 = vsel %vm652, %v638, 0
          %v657 = vsel %vm652, %v639, 0
          %659 = vmatpush.bf16.msra.mxu0 0
          %660 = vmatpush.bf16.msra.mxu0 0
          %661 = vmatpush.bf16.msra.mxu0 0
          %662 = vmatpush.bf16.msra.mxu0 0
          %663 = vmatpush.bf16.msra.mxu0 0
          %664 = vmatpush.bf16.msra.mxu0 0
          %665 = vmatpush.bf16.msra.mxu0 %v649
          %666 = vmatpush.bf16.msra.mxu0 %v648
          %667 = vmatmul.bf16.gmra.mxu0 %v654
          %v668 = vpop.f32.mrf.mxu0
          %v669 = vadd.f32 0.0, %v668
          %v670 = vpop.f32.mrf.mxu0
          %v671 = vadd.f32 0.0, %v670
          %672 = vmatmul.bf16.gmra.mxu0 %v657
          %v673 = vpop.f32.mrf.mxu0
          %v674 = vadd.f32 0.0, %v673
          %v675 = vpop.f32.mrf.mxu0
          %v676 = vadd.f32 0.0, %v675
          %677 = vdwg.mxu0
          %v678 = vtanh.pop %v669
          %v679 = vtanh.pop %v671
          %v680 = vtanh.pop %v674
          %v681 = vtanh.pop %v676
          %v682 = vpack.c.bf16 %v678, %v678
          %v683 = vpack.c.bf16 %v679, %v679
          %v684 = vpack.c.bf16 %v680, %v680
          %v685 = vpack.c.bf16 %v681, %v681
          %vm686 = vcmask 257024
          %687 = vst.msk [vmem:[#allocation2] sm:$0xf] %vm686, %v682
          %688 = vst.msk [vmem:[#allocation2 + $0x4] sm:$0xf] %vm686, %v683
          %689 = vst.msk [vmem:[#allocation2 + $0x8] sm:$0xf] %vm686, %v684
          %690 = vst.msk [vmem:[#allocation2 + $0xc] sm:$0xf] %vm686, %v685
          %v691 = vld [vmem:[%s262] sm:$0xff]
          %v692 = vsub.f32 %v678, %v680
          %v693 = vsub.f32 %v679, %v681
          %s694 = smul.u32 %s31, 16
          %v695 = vlaneseq
          %v696 = vshrl.u32 %v695, 7
          %v697 = vadd.s32 %v696, 8
          %v698 = vstv %s694
          %v699 = vadd.s32 %v698, %v696
          %v700 = vadd.s32 %v698, %v697
          %vm701 = vcmp.ge.s32.totalorder %v699, 0
          %vm702 = vcmp.ge.s32.totalorder %v700, 0
          %s703 = sld [smem:[#allocation4]]
          %v704 = vstv %s703
          %vm705 = vcmp.lt.s32.totalorder %v699, %v704
          %vm706 = vcmp.lt.s32.totalorder %v700, %v704
          %vm707 = vmand %vm701, %vm705
          %vm708 = vmand %vm702, %vm706
          %v709 = vsel %vm707, 1.0, 0.0
          %v710 = vsel %vm708, 1.0, 0.0
          %v711 = vadd.f32 %v709, 0.0
          %v712 = vadd.f32 %v710, 0.0
          %vm713 = vcmp.ge.s32.totalorder %v699, 16
          %vm714 = vcmp.ge.s32.totalorder %v700, 16
          %s715 = sld [smem:[#allocation4 + $0x1]]
          %s716 = sadd.s32 %s715, 16
          %v717 = vstv %s716
          %vm718 = vcmp.lt.s32.totalorder %v699, %v717
          %vm719 = vcmp.lt.s32.totalorder %v700, %v717
          %vm720 = vmand %vm713, %vm718
          %vm721 = vmand %vm714, %vm719
          %v722 = vsel %vm720, 1.0, 0.0
          %v723 = vsel %vm721, 1.0, 0.0
          %v724 = vadd.f32 %v711, %v722
          %v725 = vadd.f32 %v712, %v723
          %v726 = vmul.f32 %v692, %v724
          %v727 = vmul.f32 %v693, %v725
          %v728 = vand.u32 2147483647, %v726
          %v729 = vand.u32 2147483647, %v727
          %v730 = vsel %vm652, %v728, 0.0
          %v731 = vsel %vm652, %v729, 0.0
          %v732 = vadd.f32 %v730, %v731
          %733 = vadd.xlane.f32.xlu0 %v732
          %v734 = vpop.xlane.xlu0 %733
          %v735 = vrot.slane %v734, 4
          %v736 = vadd.f32 %v734, %v735
          %v737 = vrot.slane %v736, 2
          %v738 = vadd.f32 %v736, %v737
          %v739 = vrot.slane %v738, 1
          %v740 = vadd.f32 %v738, %v739
          %s741 = vtos %v740
          %v742 = vstv %s741
          %v743 = vadd.f32 %v691, %v742
          %744 = vst [vmem:[%s262] sm:$0xff] %v743
        $region44: #{tpu_custom_call.1} parent=35 // pred_fallthru
          _
        %s745 = sand.u32 %s152, 1
        %s746 = scalar_lea.sflag [#allocation6], %s745
        %s747 = sand.u32 %s152, 1
        %s748 = smul.addr %s747, 8
        %s749 = scalar_lea.vmem [#allocation5], %s748
        // Predicated region
        $region45: #{tpu_custom_call.1} parent=35 // pred_check
          %p750 = pneg %p162
        $region46: #{tpu_custom_call.1} parent=35 // pred_check_branch
          %752 = sbr.rel (%p750) target = $region48
        $region47: #{tpu_custom_call.1} parent=35 // pred_region
          %754 = vsyncadd %s746, 0
          %s755 = smul.addr %s31, 8
          %s756 = scalar_lea.hbm %s5, %s755
          %s758 = sshll.u32 %s749, 4
          %s759 = int_to_ptr.vmem [resolvable:$true] %s758
          %s760 = sshll.u32 %s756, 4
          %s761 = int_to_ptr.hbm [resolvable:$true] %s760
          %763 = dma.vmem_to_hbm [thread:$0]  %s759, 128, %s761, %s746
        $region48: #{tpu_custom_call.1} parent=35 // pred_fallthru
          _
      $region36: #{tpu_custom_call.1} parent=5 // pred_fallthru
        _
      %p764 = scmp.le.s32.totalorder 2, %s22
      // Predicated region
      $region49: #{tpu_custom_call.1} parent=5 // pred_check
        %p765 = pneg %p764
      $region50: #{tpu_custom_call.1} parent=5 // pred_check_branch
        %767 = sbr.rel (%p765) target = $region52
      $region51: #{tpu_custom_call.1} parent=5 // pred_region
        %s768 = ssub.s32 %s22, 2
        // Predicated region
        $region53: #{tpu_custom_call.1} parent=51 // pred_check
          %p769 = pneg %p168
        $region54: #{tpu_custom_call.1} parent=51 // pred_check_branch
          %771 = sbr.rel (%p769) target = $region56
        $region55: #{tpu_custom_call.1} parent=51 // pred_region
          %s772 = sand.u32 %s153, 1
          %s773 = scalar_lea.sflag [#allocation6], %s772
          %s774 = sand.u32 %s153, 1
          %s775 = smul.addr %s774, 8
          %s776 = scalar_lea.vmem [#allocation5], %s775
          %778 = dma.done %s773, 128
        $region56: #{tpu_custom_call.1} parent=51 // pred_fallthru
          _
      $region52: #{tpu_custom_call.1} parent=5 // pred_fallthru
        _
    $region6: #{tpu_custom_call.1} parent=1 // loop_footer
      %s26 = sadd.s32 1, %s22
    $region7: #{tpu_custom_call.1} parent=1 // loop_footer_branch
      %21 = sbr.rel target = $region3
    $region8: #{tpu_custom_call.1} parent=1 // loop_exit
      _
    %779 = vsyncpa [#allocation6], 1
    %s780 = scalar_lea.sflag [#allocation6], 1
    %781 = vsyncpa %s780, 1

</llo_original>
